<compile_context>
chip_gen: v7x
topology: tpu7x:2x2x1
jax: 0.10.0
libtpu: 0.0.40
codegen_flags: <defaults>
</compile_context>

<pallas_src>
import jax
import jax.numpy as jnp
from jax.experimental import pallas as pl
from jax.experimental.pallas import tpu as pltpu

CIN, COUT, KH, KW = 3, 3, 4, 4   # Conv2d(3, 3, 4, 1, 0)
K = CIN * KH * KW                # 48 taps per output pixel
COUT_PAD = 8                     # sublane-aligned output-channel dim


def conv_im2col_kernel(p_ref, w_ref, b_ref, o_ref):
    # p_ref : (K, P)         VMEM f32   im2col patches, P = N*OH*OW (lane axis)
    # w_ref : (COUT_PAD, K)  VMEM f32   OIHW weights flattened, zero-padded rows
    # b_ref : (COUT_PAD, 1)  VMEM f32   bias column, zero-padded rows
    # o_ref : (COUT_PAD, P)  VMEM f32
    acc = jnp.dot(w_ref[...], p_ref[...], preferred_element_type=jnp.float32)
    # One contiguous full-ref store (no per-channel masked vst.msk loops).
    o_ref[...] = (acc + b_ref[...]).astype(o_ref.dtype)


def conv_demo_forward(x, weight, bias):
    """Forward pass of ConvDemo: y = Conv2d(3, 3, k=4, s=1, p=0)(x)."""
    n, cin, h, w = x.shape
    assert cin == CIN
    oh, ow = h - KH + 1, w - KW + 1
    p = n * oh * ow

    # ---- wrapper-side layout plumbing (im2col) -------------------------------
    # One shifted window per (ci, kh, kw); this flat (ci, kh, kw) ordering is
    # identical to PyTorch's OIHW flattening, so weight.reshape(COUT, K) lines up.
    cols = [
        x[:, ci, kh:kh + oh, kw:kw + ow]             # (N, OH, OW)
        for ci in range(CIN)
        for kh in range(KH)
        for kw in range(KW)
    ]
    patches = jnp.stack(cols, axis=0).reshape(K, p)  # (K, P): P is the lane axis

    w_mat = jnp.zeros((COUT_PAD, K), x.dtype).at[:COUT].set(weight.reshape(COUT, K))
    b_col = jnp.zeros((COUT_PAD, 1), x.dtype).at[:COUT, 0].set(bias)

    out_flat = pl.pallas_call(
        conv_im2col_kernel,
        out_shape=jax.ShapeDtypeStruct((COUT_PAD, p), x.dtype),
        in_specs=[
            pl.BlockSpec(memory_space=pltpu.MemorySpace.VMEM),  # patches
            pl.BlockSpec(memory_space=pltpu.MemorySpace.VMEM),  # weights
            pl.BlockSpec(memory_space=pltpu.MemorySpace.VMEM),  # bias
        ],
        out_specs=pl.BlockSpec(memory_space=pltpu.MemorySpace.VMEM),
    )(patches, w_mat, b_col)

    # (COUT_PAD, N*OH*OW) -> (N, COUT, OH, OW)
    return out_flat[:COUT].reshape(COUT, n, oh, ow).transpose(1, 0, 2, 3)


if __name__ == "__main__":
    key = jax.random.PRNGKey(0)
    kx, kw_, kb = jax.random.split(key, 3)

    # Deterministic inputs (mirrors PyTorch Conv2d's U(-1/sqrt(fan_in), ...)).
    x = jax.random.normal(kx, (2, CIN, 16, 16), dtype=jnp.float32)
    bound = 1.0 / float((CIN * KH * KW) ** 0.5)
    weight = jax.random.uniform(kw_, (COUT, CIN, KH, KW), jnp.float32, -bound, bound)
    bias = jax.random.uniform(kb, (COUT,), jnp.float32, -bound, bound)

    out = jax.jit(conv_demo_forward)(x, weight, bias)
    out = jax.block_until_ready(out)

    # Correctness check against XLA's reference convolution.
    ref = jax.lax.conv_general_dilated(
        x, weight, window_strides=(1, 1), padding="VALID",
        dimension_numbers=("NCHW", "OIHW", "NCHW"),
    ) + bias[None, :, None, None]

    assert out.shape == (2, COUT, 13, 13), out.shape
    assert out.dtype == jnp.float32
    assert jnp.allclose(out, ref, atol=1e-5, rtol=1e-5)
    print("KERNEL_OK")
</pallas_src>

<mosaic_0001>
module attributes {stable_mosaic.version = 11 : i64} {
  func.func @conv_im2col_kernel(%arg0: memref<48x338xf32, #tpu.memory_space<vmem>>, %arg1: memref<8x48xf32, #tpu.memory_space<vmem>>, %arg2: memref<8x1xf32, #tpu.memory_space<vmem>>, %arg3: memref<8x338xf32, #tpu.memory_space<vmem>>) attributes {dimension_semantics = [], scalar_prefetch = 0 : i64, scratch_operands = 0 : i64, tpu.core_type = #tpu.core_type<tc>} {
    %c0 = arith.constant 0 : index
    %c0_0 = arith.constant 0 : index
    %0 = vector.load %arg1[%c0, %c0_0] : memref<8x48xf32, #tpu.memory_space<vmem>>, vector<8x48xf32>
    %c0_1 = arith.constant 0 : index
    %c0_2 = arith.constant 0 : index
    %1 = vector.load %arg0[%c0_1, %c0_2] : memref<48x338xf32, #tpu.memory_space<vmem>>, vector<48x338xf32>
    %cst = arith.constant dense<0.000000e+00> : vector<8x338xf32>
    %2 = tpu.matmul %0, %1, %cst {dimension_numbers = #tpu.dot_dimension_numbers<[1], [0], [0], [1], [0, 0, 1, 1], [], []>} : vector<8x48xf32>, vector<48x338xf32>, vector<8x338xf32> -> vector<8x338xf32>
    %c0_3 = arith.constant 0 : index
    %c0_4 = arith.constant 0 : index
    %3 = vector.load %arg2[%c0_3, %c0_4] : memref<8x1xf32, #tpu.memory_space<vmem>>, vector<8x1xf32>
    %4 = vector.broadcast %3 : vector<8x1xf32> to vector<8x338xf32>
    %5 = arith.addf %2, %4 : vector<8x338xf32>
    %c0_5 = arith.constant 0 : index
    %c0_6 = arith.constant 0 : index
    %6 = vector.load %arg3[%c0_5, %c0_6] : memref<8x338xf32, #tpu.memory_space<vmem>>, vector<8x338xf32>
    tpu.vector_store %arg3[%c0_5, %c0_6], %5 {strides = array<i32>} : memref<8x338xf32, #tpu.memory_space<vmem>>, vector<8x338xf32>,
    return
  }
}

</mosaic_0001>

<llo_original>
// kernel: conv_demo_forward.1
$region0: #{conv_demo_forward.1}
  #allocation0 [shape = 'u32[]', space=smem, size = 0x4, offset = 0x4, fixed_abs, tag = 'smem constant byte address 0x4 - core index']
  #allocation1 [shape = 'u32[144,128]{1,0:T(1,128)}', space=vmem, size = 0x12000, scoped, tag = 'internal scratch']
  %s0 = inlined_call_operand.vmem [shape: f32[48,338], index: 0, kind: input, shape index: {}]
  %s1 = inlined_call_operand.vmem [shape: f32[8,48], index: 1, kind: input, shape index: {}]
  %s2 = inlined_call_operand.vmem [shape: f32[8,1], index: 2, kind: input, shape index: {}]
  %s3 = inlined_call_operand.vmem [shape: f32[8,338], index: 3, kind: output, shape index: {}]
  %s4 = sld [smem:[#allocation0]]
  $region22: #{conv_demo_forward.1} parent=0
    _
  %s6 = ssub.s32 1, %s4
  %s7 = scalar_select 0, %s6, %s4
  // Predicated region
  $region2: #{conv_demo_forward.1} parent=0 // pred_check
    _
  $region3: #{conv_demo_forward.1} parent=0 // pred_check_branch
    %9 = sbr.rel (0) target = $region5
  $region4: #{conv_demo_forward.1} parent=0 // pred_region
    _
  $region5: #{conv_demo_forward.1} parent=0 // pred_fallthru
    _
  // Predicated region
  $region6: #{conv_demo_forward.1} parent=0 // pred_check
    _
  $region7: #{conv_demo_forward.1} parent=0 // pred_check_branch
    %11 = sbr.rel (0) target = $region9
  $region8: #{conv_demo_forward.1} parent=0 // pred_region
    _
  $region9: #{conv_demo_forward.1} parent=0 // pred_fallthru
    _
  // Predicated region
  $region10: #{conv_demo_forward.1} parent=0 // pred_check
    _
  $region11: #{conv_demo_forward.1} parent=0 // pred_check_branch
    %13 = sbr.rel (0) target = $region13
  $region12: #{conv_demo_forward.1} parent=0 // pred_region
    _
  $region13: #{conv_demo_forward.1} parent=0 // pred_fallthru
    _
  %v14 = vld [vmem:[%s1] sm:$0xff]
  %v15 = vld [vmem:[%s0] sm:$0xff]
  %v16 = vld [vmem:[%s0 + $0x8] sm:$0xff]
  %v17 = vld [vmem:[%s0 + $0x10] sm:$0xff]
  %v18 = vld [vmem:[%s0 + $0x18] sm:$0xff]
  %v19 = vld [vmem:[%s0 + $0x20] sm:$0xff]
  %v20 = vld [vmem:[%s0 + $0x28] sm:$0xff]
  %v21 = vld [vmem:[%s0 + $0x30] sm:$0xff]
  %v22 = vld [vmem:[%s0 + $0x38] sm:$0xff]
  %v23 = vld [vmem:[%s0 + $0x40] sm:$0xff]
  %v24 = vld [vmem:[%s0 + $0x48] sm:$0xff]
  %v25 = vld [vmem:[%s0 + $0x50] sm:$0xff]
  %v26 = vld [vmem:[%s0 + $0x58] sm:$0xff]
  %v27 = vld [vmem:[%s0 + $0x60] sm:$0xff]
  %v28 = vld [vmem:[%s0 + $0x68] sm:$0xff]
  %v29 = vld [vmem:[%s0 + $0x70] sm:$0xff]
  %v30 = vld [vmem:[%s0 + $0x78] sm:$0xff]
  %v31 = vld [vmem:[%s0 + $0x80] sm:$0xff]
  %v32 = vld [vmem:[%s0 + $0x88] sm:$0xff]
  %v33 = vld [vmem:[%s2] sm:$0xff]
  %35 = vset.pattern.permute.xlu0 0
  %36 = vperm.xlu0 %35, %v33
  %v37 = vpop.permute.xlu0 %36
  %vm39 = vcmask 392192
  %v41 = vsel %vm39, %v14, 0
  %43 = vmatprep.subr.mxu0 %v16
  %44 = vmatpush1.msra.mxu0 %v15
  %45 = vmatprep.subr.mxu0 %v19
  %46 = vmatpush1.msra.mxu0 %v18
  %47 = vmatprep.subr.mxu0 %v22
  %48 = vmatpush1.msra.mxu0 %v21
  %49 = vmatprep.subr.mxu0 %v25
  %50 = vmatpush1.msra.mxu0 %v24
  %51 = vmatprep.subr.mxu0 %v28
  %52 = vmatpush1.msra.mxu0 %v27
  %53 = vmatprep.subr.mxu0 %v31
  %54 = vmatpush1.msra.mxu0 %v30
  %55 = vmatprep.subr.mxu0 0.0
  %56 = vmatpush1.msra.mxu0 0.0
  %57 = vmatprep.subr.mxu0 0.0
  %58 = vmatpush1.msra.mxu0 0.0
  %59 = vmatprep.subr.mxu0 0.0
  %60 = vmatpush1.msra.mxu0 0.0
  %61 = vmatprep.subr.mxu0 0.0
  %62 = vmatpush1.msra.mxu0 0.0
  %63 = vmatprep.subr.mxu0 0.0
  %64 = vmatpush1.msra.mxu0 0.0
  %65 = vmatprep.subr.mxu0 0.0
  %66 = vmatpush1.msra.mxu0 0.0
  %67 = vmatprep.subr.mxu0 0.0
  %68 = vmatpush1.msra.mxu0 0.0
  %69 = vmatprep.subr.mxu0 0.0
  %70 = vmatpush1.msra.mxu0 0.0
  %71 = vmatprep.subr.mxu0 0.0
  %72 = vmatpush1.msra.mxu0 0.0
  %73 = vmatprep.subr.mxu0 0.0
  %74 = vmatpush1.msra.mxu0 0.0
  %75 = vmatprep.subr.mxu0 0.0
  %76 = vmatpush1.msra.mxu0 0.0
  %77 = vmatprep.subr.mxu0 0.0
  %78 = vmatpush1.msra.mxu0 0.0
  %79 = vmatprep.subr.mxu0 0.0
  %80 = vmatpush1.msra.mxu0 0.0
  %81 = vmatprep.subr.mxu0 0.0
  %82 = vmatpush1.msra.mxu0 0.0
  %83 = vmatprep.subr.mxu0 0.0
  %84 = vmatpush1.msra.mxu0 0.0
  %85 = vmatprep.subr.mxu0 0.0
  %86 = vmatpush1.msra.mxu0 0.0
  %87 = vmatprep.subr.mxu0 0.0
  %88 = vmatpush1.msra.mxu0 0.0
  %89 = vmatprep.subr.mxu0 0.0
  %90 = vmatpush1.msra.mxu0 0.0
  %91 = vmatprep.subr.mxu0 0.0
  %92 = vmatpush1.msra.mxu0 0.0
  %93 = vmatprep.subr.mxu0 0.0
  %94 = vmatpush1.msra.mxu0 0.0
  %95 = vmatprep.subr.mxu0 0.0
  %96 = vmatpush1.msra.mxu0 0.0
  %97 = vmatprep.subr.mxu0 0.0
  %98 = vmatpush1.msra.mxu0 0.0
  %99 = vmatprep.subr.mxu0 0.0
  %100 = vmatpush1.msra.mxu0 0.0
  %101 = vmatprep.subr.mxu0 0.0
  %102 = vmatpush1.msra.mxu0 0.0
  %103 = vmatprep.subr.mxu0 0.0
  %104 = vmatpush1.msra.mxu0 0.0
  %105 = vmatprep.subr.mxu0 0.0
  %106 = vmatpush1.msra.mxu0 0.0
  %107 = vmatprep.mubr.f32.mxu0 0.0
  %108 = vmatmul.mubr.f32.gmra.mrb[0].mxu0 %v41
  %v109 = vpop.f32.mrb[0].mxu0
  %v110 = vadd.f32 %v37, %v109
  %v111 = vpop.f32.mrb[0].mxu0
  %v112 = vadd.f32 %v37, %v111
  %113 = vdwg.mxu0
  %114 = vmatprep.subr.mxu0 0.0
  %115 = vmatpush1.msra.mxu0 %v17
  %116 = vmatprep.subr.mxu0 0.0
  %117 = vmatpush1.msra.mxu0 %v20
  %118 = vmatprep.subr.mxu0 0.0
  %119 = vmatpush1.msra.mxu0 %v23
  %120 = vmatprep.subr.mxu0 0.0
  %121 = vmatpush1.msra.mxu0 %v26
  %122 = vmatprep.subr.mxu0 0.0
  %123 = vmatpush1.msra.mxu0 %v29
  %124 = vmatprep.subr.mxu0 0.0
  %125 = vmatpush1.msra.mxu0 %v32
  %126 = vmatprep.subr.mxu0 0.0
  %127 = vmatpush1.msra.mxu0 0.0
  %128 = vmatprep.subr.mxu0 0.0
  %129 = vmatpush1.msra.mxu0 0.0
  %130 = vmatprep.subr.mxu0 0.0
  %131 = vmatpush1.msra.mxu0 0.0
  %132 = vmatprep.subr.mxu0 0.0
  %133 = vmatpush1.msra.mxu0 0.0
  %134 = vmatprep.subr.mxu0 0.0
  %135 = vmatpush1.msra.mxu0 0.0
  %136 = vmatprep.subr.mxu0 0.0
  %137 = vmatpush1.msra.mxu0 0.0
  %138 = vmatprep.subr.mxu0 0.0
  %139 = vmatpush1.msra.mxu0 0.0
  %140 = vmatprep.subr.mxu0 0.0
  %141 = vmatpush1.msra.mxu0 0.0
  %142 = vmatprep.subr.mxu0 0.0
  %143 = vmatpush1.msra.mxu0 0.0
  %144 = vmatprep.subr.mxu0 0.0
  %145 = vmatpush1.msra.mxu0 0.0
  %146 = vmatprep.subr.mxu0 0.0
  %147 = vmatpush1.msra.mxu0 0.0
  %148 = vmatprep.subr.mxu0 0.0
  %149 = vmatpush1.msra.mxu0 0.0
  %150 = vmatprep.subr.mxu0 0.0
  %151 = vmatpush1.msra.mxu0 0.0
  %152 = vmatprep.subr.mxu0 0.0
  %153 = vmatpush1.msra.mxu0 0.0
  %154 = vmatprep.subr.mxu0 0.0
  %155 = vmatpush1.msra.mxu0 0.0
  %156 = vmatprep.subr.mxu0 0.0
  %157 = vmatpush1.msra.mxu0 0.0
  %158 = vmatprep.subr.mxu0 0.0
  %159 = vmatpush1.msra.mxu0 0.0
  %160 = vmatprep.subr.mxu0 0.0
  %161 = vmatpush1.msra.mxu0 0.0
  %162 = vmatprep.subr.mxu0 0.0
  %163 = vmatpush1.msra.mxu0 0.0
  %164 = vmatprep.subr.mxu0 0.0
  %165 = vmatpush1.msra.mxu0 0.0
  %166 = vmatprep.subr.mxu0 0.0
  %167 = vmatpush1.msra.mxu0 0.0
  %168 = vmatprep.subr.mxu0 0.0
  %169 = vmatpush1.msra.mxu0 0.0
  %170 = vmatprep.subr.mxu0 0.0
  %171 = vmatpush1.msra.mxu0 0.0
  %172 = vmatprep.subr.mxu0 0.0
  %173 = vmatpush1.msra.mxu0 0.0
  %174 = vmatprep.subr.mxu0 0.0
  %175 = vmatpush1.msra.mxu0 0.0
  %176 = vmatprep.subr.mxu0 0.0
  %177 = vmatpush1.msra.mxu0 0.0
  %178 = vmatprep.mubr.f32.mxu0 0.0
  %179 = vmatmul.mubr.f32.gmra.mrb[0].mxu0 %v41
  %v180 = vpop.f32.mrb[0].mxu0
  %v181 = vadd.f32 %v37, %v180
  %v182 = vpop.f32.mrb[0].mxu0
  %183 = vdwg.mxu0
  %184 = vst [vmem:[%s3] sm:$0xff] %v110
  %185 = vst [vmem:[%s3 + $0x8] sm:$0xff] %v112
  %vm186 = vcmask 670720
  %187 = vst.msk [vmem:[%s3 + $0x10] sm:$0xff] %vm186, %v181
  // Predicated region
  $region14: #{conv_demo_forward.1} parent=0 // pred_check
    _
  $region15: #{conv_demo_forward.1} parent=0 // pred_check_branch
    %189 = sbr.rel (0) target = $region17
  $region16: #{conv_demo_forward.1} parent=0 // pred_region
    _
  $region17: #{conv_demo_forward.1} parent=0 // pred_fallthru
    _
  // Predicated region
  $region18: #{conv_demo_forward.1} parent=0 // pred_check
    _
  $region19: #{conv_demo_forward.1} parent=0 // pred_check_branch
    %191 = sbr.rel (0) target = $region21
  $region20: #{conv_demo_forward.1} parent=0 // pred_region
    _
  $region21: #{conv_demo_forward.1} parent=0 // pred_fallthru
    _

</llo_original>
